<compile_context>
chip_gen: v7x
topology: tpu7x:2x2x1
jax: 0.10.0
libtpu: 0.0.40
codegen_flags: <defaults>
</compile_context>

<pallas_src>
import numpy as np
import jax
import jax.numpy as jnp
from jax.experimental import pallas as pl
from jax.experimental.pallas import tpu as pltpu

try:  # fast C Hungarian solver (same one the PyTorch reference uses)
    from scipy.optimize import linear_sum_assignment as _scipy_lsa
except Exception:  # pragma: no cover
    _scipy_lsa = None


# ----------------------------------------------------------------------------
# helpers
# ----------------------------------------------------------------------------
def _round_up(x, m):
    return ((x + m - 1) // m) * m


def _padded_tile_bytes(shape, itemsize=4):
    """VMEM footprint of one f32 buffer: last dim padded to 128 lanes,
    second-to-last to 8 sublanes."""
    s = list(shape)
    s[-1] = _round_up(s[-1], 128)
    s[-2] = _round_up(s[-2], 8)
    n = 1
    for d in s:
        n *= int(d)
    return n * itemsize


def _vmem_capacity_bytes():
    try:
        return int(pltpu.get_tpu_info().vmem_capacity_bytes)
    except Exception:
        # Conservative fallback = v7x per-TensorCore VMEM (safe on v5e/v6e too).
        return 64 << 20


# ----------------------------------------------------------------------------
# Pallas kernel: batched pairwise Euclidean cost matrices (torch.cdist),
# batch-last layout.  Blocks: r/t (N, P, TB), out (N, N, TB).
# ----------------------------------------------------------------------------
def _cost_kernel(r_ref, t_ref, c_ref):
    r = r_ref[...].astype(jnp.float32)          # (N, P, TB)
    t = t_ref[...].astype(jnp.float32)          # (N, P, TB)
    n, p_dim, _tb = r.shape
    d2 = None
    for p in range(p_dim):                      # P is tiny (3 or 4) and static
        rp = r[:, p, :]                         # (N, TB)
        tp = t[:, p, :]                         # (N, TB)
        diff = rp[:, None, :] - tp[None, :, :]  # (N, N, TB); lane axis = batch
        sq = diff * diff
        d2 = sq if d2 is None else d2 + sq
    # d2 >= 0 by construction (sum of squares): no clamp needed, no
    # catastrophic-cancellation issue from the r2+t2-2rt expansion.
    c_ref[...] = jnp.sqrt(d2)


def pairwise_cost_batch_last(recons_bl, target_bl, *, vmem_frac=0.75):
    """recons_bl / target_bl: (N, P, B) batch-last f32 arrays.
    Returns cost (N, N, B) with cost[n, m, b] = ||recons[b, n] - target[b, m]||_2."""
    N, P, B = recons_bl.shape
    capacity = _vmem_capacity_bytes()
    budget = int(capacity * vmem_frac)

    def block_bytes(tb):
        inp = 2 * 2 * _padded_tile_bytes((N, P, tb))   # 2 inputs, double-buffered
        out = 2 * _padded_tile_bytes((N, N, tb))       # output, double-buffered
        tmp = 2 * _padded_tile_bytes((N, N, tb))       # diff / d2 temporaries
        return inp + out + tmp

    if B <= 128:
        # Lanes pad to 128 regardless, so splitting the batch axis below 128
        # saves no VMEM and would break the lane-divisibility rule.
        tb = B
    else:
        per_k = max(block_bytes(128), 1)
        k = max(1, min(B // 128, budget // per_k))
        tb = k * 128
        # v7x has 2 TensorCores: keep >= 2 grid steps so the 'parallel' batch
        # axis can be sharded across both cores.
        if tb >= B and B >= 256:
            tb = _round_up((B + 1) // 2, 128)

    total_block_bytes = block_bytes(tb)
    vmem_limit = int(min(0.9 * capacity,
                         max(total_block_bytes + (8 << 20), 32 << 20)))

    grid = (pl.cdiv(B, tb),)
    return pl.pallas_call(
        _cost_kernel,
        out_shape=jax.ShapeDtypeStruct((N, N, B), jnp.float32),
        grid=grid,
        in_specs=[
            pl.BlockSpec((N, P, tb), lambda g: (0, 0, g)),
            pl.BlockSpec((N, P, tb), lambda g: (0, 0, g)),
        ],
        out_specs=pl.BlockSpec((N, N, tb), lambda g: (0, 0, g)),
        compiler_params=pltpu.CompilerParams(
            dimension_semantics=("parallel",),
            vmem_limit_bytes=vmem_limit),
    )(recons_bl, target_bl)


# ----------------------------------------------------------------------------
# Host-side Hungarian fallback (only used if scipy is unavailable).
# Jonker-Volgenant O(n^3); returns col_ind such that row i -> column col_ind[i].
# ----------------------------------------------------------------------------
def _linear_sum_assignment_cols(cost):
    n = cost.shape[0]
    INF = float("inf")
    u = [0.0] * (n + 1)
    v = [0.0] * (n + 1)
    p = [0] * (n + 1)
    way = [0] * (n + 1)
    for i in range(1, n + 1):
        p[0] = i
        j0 = 0
        minv = [INF] * (n + 1)
        used = [False] * (n + 1)
        while True:
            used[j0] = True
            i0 = p[j0]
            delta = INF
            j1 = -1
            for j in range(1, n + 1):
                if not used[j]:
                    cur = float(cost[i0 - 1, j - 1]) - u[i0] - v[j]
                    if cur < minv[j]:
                        minv[j] = cur
                        way[j] = j0
                    if minv[j] < delta:
                        delta = minv[j]
                        j1 = j
            for j in range(n + 1):
                if used[j]:
                    u[p[j]] += delta
                    v[j] -= delta
                else:
                    minv[j] -= delta
            j0 = j1
            if p[j0] == 0:
                break
        while j0:
            j1 = way[j0]
            p[j0] = p[j1]
            j0 = j1
    col_of_row = [0] * n
    for j in range(1, n + 1):
        if p[j] != 0:
            col_of_row[p[j] - 1] = j - 1
    return np.asarray(col_of_row, dtype=np.int64)


# ----------------------------------------------------------------------------
# Module wrapper
# ----------------------------------------------------------------------------
class HungarianMSELoss:
    """Permutation-invariant (Hungarian) MSE loss for jets. Forward pass only."""

    def __call__(self, recons, target, abs_coord=True, polar_coord=False):
        if not (abs_coord and not polar_coord):
            # TODO(synk): polar / jet-relative preprocessing (get_p_polar,
            # get_polar_rel, get_p_cartesian) not reproduced; default path only.
            raise NotImplementedError("only the absolute-Cartesian path is implemented")

        recons = jnp.asarray(recons, jnp.float32)
        target = jnp.asarray(target, jnp.float32)
        B, N, P = recons.shape

        # Batch-last layout so the cost kernel's 128-lane axis is the batch.
        recons_bl = jnp.transpose(recons, (1, 2, 0))   # (N, P, B)
        target_bl = jnp.transpose(target, (1, 2, 0))   # (N, P, B)

        # 1) cost[n, m, b] = ||recons[b, n] - target[b, m]||   (== torch.cdist)
        cost = pairwise_cost_batch_last(recons_bl, target_bl)
        cost_np = np.asarray(jax.device_get(cost))     # (N, N, B) float32

        # 2) Hungarian assignment per batch (host, sequential -- as reference).
        # 3) Matched MSE read straight off the cost matrix: the reference pairs
        #    recons[b, matching[b, j]] with target[b, j], whose squared error
        #    summed over features is exactly cost[matching[b, j], j, b]^2.
        cols = np.arange(N)
        total = 0.0
        for b in range(B):
            M = cost_np[:, :, b]
            if _scipy_lsa is not None:
                matching = _scipy_lsa(M)[1]
            else:
                matching = _linear_sum_assignment_cols(M)
            sel = M[matching, cols].astype(np.float64)
            total += float(np.dot(sel, sel))
        loss = total / float(B * N * P)
        return jnp.asarray(loss, dtype=jnp.float32)


if __name__ == "__main__":
    B, N, P = 2, 8, 4  # batch, num_particles, features (px, py, pz, E)
    key = jax.random.PRNGKey(0)
    k1, k2 = jax.random.split(key)
    recons = jax.random.normal(k1, (B, N, P), dtype=jnp.float32)
    target = jax.random.normal(k2, (B, N, P), dtype=jnp.float32)

    loss_fn = HungarianMSELoss()
    loss = loss_fn(recons, target)
    loss = jax.block_until_ready(loss)
    assert bool(jnp.isfinite(loss))

    # Pure-numpy reference with the same (reference-faithful) permutation quirk.
    r_np = np.asarray(recons)
    t_np = np.asarray(target)
    ref_total = 0.0
    for b in range(B):
        d = np.sqrt(((r_np[b][:, None, :] - t_np[b][None, :, :]) ** 2).sum(-1))
        m = (_scipy_lsa(d)[1] if _scipy_lsa is not None
             else _linear_sum_assignment_cols(d))
        ref_total += float(((r_np[b][m] - t_np[b]) ** 2).sum())
    ref = ref_total / float(B * N * P)
    assert abs(float(loss) - ref) <= 1e-4 * max(1.0, abs(ref))

    print("KERNEL_OK")
</pallas_src>

<mosaic_0001>
module attributes {stable_mosaic.version = 11 : i64} {
  func.func @_cost_kernel(%arg0: i32, %arg1: memref<8x4x2xf32, #tpu.memory_space<vmem>>, %arg2: memref<8x4x2xf32, #tpu.memory_space<vmem>>, %arg3: memref<8x8x2xf32, #tpu.memory_space<vmem>>) attributes {dimension_semantics = [#tpu.dimension_semantics<parallel>], iteration_bounds = array<i64: 1>, scalar_prefetch = 0 : i64, scratch_operands = 0 : i64, tpu.core_type = #tpu.core_type<tc>, window_params = [{transform_indices = @transform_0, window_bounds = array<i64: 8, 4, 2>}, {transform_indices = @transform_1, window_bounds = array<i64: 8, 4, 2>}, {transform_indices = @transform_2, window_bounds = array<i64: 8, 8, 2>}]} {
    %c0 = arith.constant 0 : index
    %c0_0 = arith.constant 0 : index
    %c0_1 = arith.constant 0 : index
    %0 = vector.load %arg1[%c0, %c0_0, %c0_1] : memref<8x4x2xf32, #tpu.memory_space<vmem>>, vector<8x4x2xf32>
    %c0_2 = arith.constant 0 : index
    %c0_3 = arith.constant 0 : index
    %c0_4 = arith.constant 0 : index
    %1 = vector.load %arg2[%c0_2, %c0_3, %c0_4] : memref<8x4x2xf32, #tpu.memory_space<vmem>>, vector<8x4x2xf32>
    %2 = vector.extract_strided_slice %0 {offsets = [0, 0, 0], sizes = [8, 1, 2], strides = [1, 1, 1]} : vector<8x4x2xf32> to vector<8x1x2xf32>
    %3 = vector.shape_cast %2 : vector<8x1x2xf32> to vector<8x2xf32>
    %4 = vector.extract_strided_slice %1 {offsets = [0, 0, 0], sizes = [8, 1, 2], strides = [1, 1, 1]} : vector<8x4x2xf32> to vector<8x1x2xf32>
    %5 = vector.shape_cast %4 : vector<8x1x2xf32> to vector<8x2xf32>
    %6 = vector.shape_cast %3 : vector<8x2xf32> to vector<8x1x2xf32>
    %7 = vector.shape_cast %5 : vector<8x2xf32> to vector<1x8x2xf32>
    %8 = vector.broadcast %6 : vector<8x1x2xf32> to vector<8x8x2xf32>
    %9 = vector.broadcast %7 : vector<1x8x2xf32> to vector<8x8x2xf32>
    %10 = arith.subf %8, %9 : vector<8x8x2xf32>
    %11 = arith.mulf %10, %10 : vector<8x8x2xf32>
    %12 = vector.extract_strided_slice %0 {offsets = [0, 1, 0], sizes = [8, 1, 2], strides = [1, 1, 1]} : vector<8x4x2xf32> to vector<8x1x2xf32>
    %13 = vector.shape_cast %12 : vector<8x1x2xf32> to vector<8x2xf32>
    %14 = vector.extract_strided_slice %1 {offsets = [0, 1, 0], sizes = [8, 1, 2], strides = [1, 1, 1]} : vector<8x4x2xf32> to vector<8x1x2xf32>
    %15 = vector.shape_cast %14 : vector<8x1x2xf32> to vector<8x2xf32>
    %16 = vector.shape_cast %13 : vector<8x2xf32> to vector<8x1x2xf32>
    %17 = vector.shape_cast %15 : vector<8x2xf32> to vector<1x8x2xf32>
    %18 = vector.broadcast %16 : vector<8x1x2xf32> to vector<8x8x2xf32>
    %19 = vector.broadcast %17 : vector<1x8x2xf32> to vector<8x8x2xf32>
    %20 = arith.subf %18, %19 : vector<8x8x2xf32>
    %21 = arith.mulf %20, %20 : vector<8x8x2xf32>
    %22 = arith.addf %11, %21 : vector<8x8x2xf32>
    %23 = vector.extract_strided_slice %0 {offsets = [0, 2, 0], sizes = [8, 1, 2], strides = [1, 1, 1]} : vector<8x4x2xf32> to vector<8x1x2xf32>
    %24 = vector.shape_cast %23 : vector<8x1x2xf32> to vector<8x2xf32>
    %25 = vector.extract_strided_slice %1 {offsets = [0, 2, 0], sizes = [8, 1, 2], strides = [1, 1, 1]} : vector<8x4x2xf32> to vector<8x1x2xf32>
    %26 = vector.shape_cast %25 : vector<8x1x2xf32> to vector<8x2xf32>
    %27 = vector.shape_cast %24 : vector<8x2xf32> to vector<8x1x2xf32>
    %28 = vector.shape_cast %26 : vector<8x2xf32> to vector<1x8x2xf32>
    %29 = vector.broadcast %27 : vector<8x1x2xf32> to vector<8x8x2xf32>
    %30 = vector.broadcast %28 : vector<1x8x2xf32> to vector<8x8x2xf32>
    %31 = arith.subf %29, %30 : vector<8x8x2xf32>
    %32 = arith.mulf %31, %31 : vector<8x8x2xf32>
    %33 = arith.addf %22, %32 : vector<8x8x2xf32>
    %34 = vector.extract_strided_slice %0 {offsets = [0, 3, 0], sizes = [8, 1, 2], strides = [1, 1, 1]} : vector<8x4x2xf32> to vector<8x1x2xf32>
    %35 = vector.shape_cast %34 : vector<8x1x2xf32> to vector<8x2xf32>
    %36 = vector.extract_strided_slice %1 {offsets = [0, 3, 0], sizes = [8, 1, 2], strides = [1, 1, 1]} : vector<8x4x2xf32> to vector<8x1x2xf32>
    %37 = vector.shape_cast %36 : vector<8x1x2xf32> to vector<8x2xf32>
    %38 = vector.shape_cast %35 : vector<8x2xf32> to vector<8x1x2xf32>
    %39 = vector.shape_cast %37 : vector<8x2xf32> to vector<1x8x2xf32>
    %40 = vector.broadcast %38 : vector<8x1x2xf32> to vector<8x8x2xf32>
    %41 = vector.broadcast %39 : vector<1x8x2xf32> to vector<8x8x2xf32>
    %42 = arith.subf %40, %41 : vector<8x8x2xf32>
    %43 = arith.mulf %42, %42 : vector<8x8x2xf32>
    %44 = arith.addf %33, %43 : vector<8x8x2xf32>
    %45 = math.sqrt %44 : vector<8x8x2xf32>
    %c0_5 = arith.constant 0 : index
    %c0_6 = arith.constant 0 : index
    %c0_7 = arith.constant 0 : index
    %46 = vector.load %arg3[%c0_5, %c0_6, %c0_7] : memref<8x8x2xf32, #tpu.memory_space<vmem>>, vector<8x8x2xf32>
    tpu.vector_store %arg3[%c0_5, %c0_6, %c0_7], %45 {strides = array<i32>} : memref<8x8x2xf32, #tpu.memory_space<vmem>>, vector<8x8x2xf32>,
    return
  }
  func.func @transform_0(%arg0: i32) -> (i32, i32, i32) {
    %c0_i32 = arith.constant 0 : i32
    %c0_i32_0 = arith.constant 0 : i32
    %c0_i32_1 = arith.constant 0 : i32
    return %c0_i32, %c0_i32_0, %arg0 : i32, i32, i32
  }
  func.func @transform_1(%arg0: i32) -> (i32, i32, i32) {
    %c0_i32 = arith.constant 0 : i32
    %c0_i32_0 = arith.constant 0 : i32
    %c0_i32_1 = arith.constant 0 : i32
    return %c0_i32, %c0_i32_0, %arg0 : i32, i32, i32
  }
  func.func @transform_2(%arg0: i32) -> (i32, i32, i32) {
    %c0_i32 = arith.constant 0 : i32
    %c0_i32_0 = arith.constant 0 : i32
    %c0_i32_1 = arith.constant 0 : i32
    return %c0_i32, %c0_i32_0, %arg0 : i32, i32, i32
  }
}

</mosaic_0001>

<llo_original>
// kernel: tpu_custom_call.1
$region0: #{tpu_custom_call.1}
  #allocation0 [shape = 'u32[]', space=smem, size = 0x4, offset = 0x4, fixed_abs, tag = 'smem constant byte address 0x4 - core index']
  #allocation1 [shape = 'u32[144,128]{1,0:T(1,128)}', space=vmem, size = 0x12000, scoped, tag = 'internal scratch']
  %s0 = inlined_call_operand.vmem [shape: f32[8,4,2], index: 0, kind: input, shape index: {}]
  %s1 = inlined_call_operand.vmem [shape: f32[8,4,2], index: 1, kind: input, shape index: {}]
  %s2 = inlined_call_operand.vmem [shape: f32[8,8,2], index: 2, kind: output, shape index: {}]
  %s3 = sld [smem:[#allocation0]]
  $region18: #{tpu_custom_call.1} parent=0
    _
  %s5 = ssub.s32 1, %s3
  %s6 = scalar_select 0, %s5, %s3
  // Predicated region
  $region2: #{tpu_custom_call.1} parent=0 // pred_check
    _
  $region3: #{tpu_custom_call.1} parent=0 // pred_check_branch
    %8 = sbr.rel (0) target = $region5
  $region4: #{tpu_custom_call.1} parent=0 // pred_region
    _
  $region5: #{tpu_custom_call.1} parent=0 // pred_fallthru
    _
  // Predicated region
  $region6: #{tpu_custom_call.1} parent=0 // pred_check
    _
  $region7: #{tpu_custom_call.1} parent=0 // pred_check_branch
    %10 = sbr.rel (0) target = $region9
  $region8: #{tpu_custom_call.1} parent=0 // pred_region
    _
  $region9: #{tpu_custom_call.1} parent=0 // pred_fallthru
    _
  %v11 = vld [vmem:[%s0] sm:$0xf]
  %v12 = vld [vmem:[%s0 + $0x4] sm:$0xf]
  %v13 = vld [vmem:[%s0 + $0x8] sm:$0xf]
  %v14 = vld [vmem:[%s0 + $0xc] sm:$0xf]
  %v15 = vld [vmem:[%s0 + $0x10] sm:$0xf]
  %v16 = vld [vmem:[%s0 + $0x14] sm:$0xf]
  %v17 = vld [vmem:[%s0 + $0x18] sm:$0xf]
  %v18 = vld [vmem:[%s0 + $0x1c] sm:$0xf]
  %v19 = vld [vmem:[%s1] sm:$0xf]
  %v20 = vld [vmem:[%s1 + $0x4] sm:$0xf]
  %v21 = vld [vmem:[%s1 + $0x8] sm:$0xf]
  %v22 = vld [vmem:[%s1 + $0xc] sm:$0xf]
  %v23 = vld [vmem:[%s1 + $0x10] sm:$0xf]
  %v24 = vld [vmem:[%s1 + $0x14] sm:$0xf]
  %v25 = vld [vmem:[%s1 + $0x18] sm:$0xf]
  %v26 = vld [vmem:[%s1 + $0x1c] sm:$0xf]
  %v27 = vlaneseq
  %v28 = vshrl.u32 %v27, 7
  %v29 = vsub.s32 0, %v28
  %v30 = vrot.slane %v11, %v29
  %v31 = vlaneseq
  %v32 = vshrl.u32 %v31, 7
  %v33 = vsub.s32 0, %v32
  %v34 = vrot.slane %v12, %v33
  %v35 = vlaneseq
  %v36 = vshrl.u32 %v35, 7
  %v37 = vsub.s32 0, %v36
  %v38 = vrot.slane %v13, %v37
  %v39 = vlaneseq
  %v40 = vshrl.u32 %v39, 7
  %v41 = vsub.s32 0, %v40
  %v42 = vrot.slane %v14, %v41
  %v43 = vlaneseq
  %v44 = vshrl.u32 %v43, 7
  %v45 = vsub.s32 0, %v44
  %v46 = vrot.slane %v15, %v45
  %v47 = vlaneseq
  %v48 = vshrl.u32 %v47, 7
  %v49 = vsub.s32 0, %v48
  %v50 = vrot.slane %v16, %v49
  %v51 = vlaneseq
  %v52 = vshrl.u32 %v51, 7
  %v53 = vsub.s32 0, %v52
  %v54 = vrot.slane %v17, %v53
  %v55 = vlaneseq
  %v56 = vshrl.u32 %v55, 7
  %v57 = vsub.s32 0, %v56
  %v58 = vrot.slane %v18, %v57
  %v67 = vrot.slane %v20, 7
  %vm68 = vcmask 1041409
  %v69 = vsel %vm68, %v67, %v19
  %v70 = vrot.slane %v21, 6
  %vm71 = vcmask 1042434
  %v72 = vsel %vm71, %v70, %v69
  %v73 = vrot.slane %v22, 5
  %vm74 = vcmask 1043459
  %v75 = vsel %vm74, %v73, %v72
  %v76 = vrot.slane %v23, 4
  %vm77 = vcmask 1044484
  %v78 = vsel %vm77, %v76, %v75
  %v79 = vrot.slane %v24, 3
  %vm80 = vcmask 1045509
  %v81 = vsel %vm80, %v79, %v78
  %v82 = vrot.slane %v25, 2
  %vm83 = vcmask 1046534
  %v84 = vsel %vm83, %v82, %v81
  %v85 = vrot.slane %v26, 1
  %vm86 = vcmask 1047559
  %v87 = vsel %vm86, %v85, %v84
  %v89 = vsub.f32 %v30, %v87
  %v90 = vsub.f32 %v34, %v87
  %v91 = vsub.f32 %v38, %v87
  %v92 = vsub.f32 %v42, %v87
  %v93 = vsub.f32 %v46, %v87
  %v94 = vsub.f32 %v50, %v87
  %v95 = vsub.f32 %v54, %v87
  %v96 = vsub.f32 %v58, %v87
  %v97 = vmul.f32 %v89, %v89
  %v98 = vmul.f32 %v90, %v90
  %v99 = vmul.f32 %v91, %v91
  %v100 = vmul.f32 %v92, %v92
  %v101 = vmul.f32 %v93, %v93
  %v102 = vmul.f32 %v94, %v94
  %v103 = vmul.f32 %v95, %v95
  %v104 = vmul.f32 %v96, %v96
  %v105 = vlaneseq
  %v106 = vshrl.u32 %v105, 7
  %v107 = vsub.s32 1, %v106
  %v108 = vrot.slane %v11, %v107
  %v109 = vlaneseq
  %v110 = vshrl.u32 %v109, 7
  %v111 = vsub.s32 1, %v110
  %v112 = vrot.slane %v12, %v111
  %v113 = vlaneseq
  %v114 = vshrl.u32 %v113, 7
  %v115 = vsub.s32 1, %v114
  %v116 = vrot.slane %v13, %v115
  %v117 = vlaneseq
  %v118 = vshrl.u32 %v117, 7
  %v119 = vsub.s32 1, %v118
  %v120 = vrot.slane %v14, %v119
  %v121 = vlaneseq
  %v122 = vshrl.u32 %v121, 7
  %v123 = vsub.s32 1, %v122
  %v124 = vrot.slane %v15, %v123
  %v125 = vlaneseq
  %v126 = vshrl.u32 %v125, 7
  %v127 = vsub.s32 1, %v126
  %v128 = vrot.slane %v16, %v127
  %v129 = vlaneseq
  %v130 = vshrl.u32 %v129, 7
  %v131 = vsub.s32 1, %v130
  %v132 = vrot.slane %v17, %v131
  %v133 = vlaneseq
  %v134 = vshrl.u32 %v133, 7
  %v135 = vsub.s32 1, %v134
  %v136 = vrot.slane %v18, %v135
  %v137 = vrot.slane %v19, 1
  %v138 = vsel %vm68, %v20, %v137
  %v139 = vrot.slane %v21, 7
  %v140 = vsel %vm71, %v139, %v138
  %v141 = vrot.slane %v22, 6
  %v142 = vsel %vm74, %v141, %v140
  %v143 = vrot.slane %v23, 5
  %v144 = vsel %vm77, %v143, %v142
  %v145 = vrot.slane %v24, 4
  %v146 = vsel %vm80, %v145, %v144
  %v147 = vrot.slane %v25, 3
  %v148 = vsel %vm83, %v147, %v146
  %v149 = vrot.slane %v26, 2
  %v150 = vsel %vm86, %v149, %v148
  %v152 = vsub.f32 %v108, %v150
  %v153 = vsub.f32 %v112, %v150
  %v154 = vsub.f32 %v116, %v150
  %v155 = vsub.f32 %v120, %v150
  %v156 = vsub.f32 %v124, %v150
  %v157 = vsub.f32 %v128, %v150
  %v158 = vsub.f32 %v132, %v150
  %v159 = vsub.f32 %v136, %v150
  %v160 = vmul.f32 %v152, %v152
  %v161 = vmul.f32 %v153, %v153
  %v162 = vmul.f32 %v154, %v154
  %v163 = vmul.f32 %v155, %v155
  %v164 = vmul.f32 %v156, %v156
  %v165 = vmul.f32 %v157, %v157
  %v166 = vmul.f32 %v158, %v158
  %v167 = vmul.f32 %v159, %v159
  %v168 = vadd.f32 %v97, %v160
  %v169 = vadd.f32 %v98, %v161
  %v170 = vadd.f32 %v99, %v162
  %v171 = vadd.f32 %v100, %v163
  %v172 = vadd.f32 %v101, %v164
  %v173 = vadd.f32 %v102, %v165
  %v174 = vadd.f32 %v103, %v166
  %v175 = vadd.f32 %v104, %v167
  %v176 = vlaneseq
  %v177 = vshrl.u32 %v176, 7
  %v178 = vsub.s32 2, %v177
  %v179 = vrot.slane %v11, %v178
  %v180 = vlaneseq
  %v181 = vshrl.u32 %v180, 7
  %v182 = vsub.s32 2, %v181
  %v183 = vrot.slane %v12, %v182
  %v184 = vlaneseq
  %v185 = vshrl.u32 %v184, 7
  %v186 = vsub.s32 2, %v185
  %v187 = vrot.slane %v13, %v186
  %v188 = vlaneseq
  %v189 = vshrl.u32 %v188, 7
  %v190 = vsub.s32 2, %v189
  %v191 = vrot.slane %v14, %v190
  %v192 = vlaneseq
  %v193 = vshrl.u32 %v192, 7
  %v194 = vsub.s32 2, %v193
  %v195 = vrot.slane %v15, %v194
  %v196 = vlaneseq
  %v197 = vshrl.u32 %v196, 7
  %v198 = vsub.s32 2, %v197
  %v199 = vrot.slane %v16, %v198
  %v200 = vlaneseq
  %v201 = vshrl.u32 %v200, 7
  %v202 = vsub.s32 2, %v201
  %v203 = vrot.slane %v17, %v202
  %v204 = vlaneseq
  %v205 = vshrl.u32 %v204, 7
  %v206 = vsub.s32 2, %v205
  %v207 = vrot.slane %v18, %v206
  %v208 = vrot.slane %v19, 2
  %v209 = vrot.slane %v20, 1
  %v210 = vsel %vm68, %v209, %v208
  %v211 = vsel %vm71, %v21, %v210
  %v212 = vrot.slane %v22, 7
  %v213 = vsel %vm74, %v212, %v211
  %v214 = vrot.slane %v23, 6
  %v215 = vsel %vm77, %v214, %v213
  %v216 = vrot.slane %v24, 5
  %v217 = vsel %vm80, %v216, %v215
  %v218 = vrot.slane %v25, 4
  %v219 = vsel %vm83, %v218, %v217
  %v220 = vrot.slane %v26, 3
  %v221 = vsel %vm86, %v220, %v219
  %v223 = vsub.f32 %v179, %v221
  %v224 = vsub.f32 %v183, %v221
  %v225 = vsub.f32 %v187, %v221
  %v226 = vsub.f32 %v191, %v221
  %v227 = vsub.f32 %v195, %v221
  %v228 = vsub.f32 %v199, %v221
  %v229 = vsub.f32 %v203, %v221
  %v230 = vsub.f32 %v207, %v221
  %v231 = vmul.f32 %v223, %v223
  %v232 = vmul.f32 %v224, %v224
  %v233 = vmul.f32 %v225, %v225
  %v234 = vmul.f32 %v226, %v226
  %v235 = vmul.f32 %v227, %v227
  %v236 = vmul.f32 %v228, %v228
  %v237 = vmul.f32 %v229, %v229
  %v238 = vmul.f32 %v230, %v230
  %v239 = vadd.f32 %v168, %v231
  %v240 = vadd.f32 %v169, %v232
  %v241 = vadd.f32 %v170, %v233
  %v242 = vadd.f32 %v171, %v234
  %v243 = vadd.f32 %v172, %v235
  %v244 = vadd.f32 %v173, %v236
  %v245 = vadd.f32 %v174, %v237
  %v246 = vadd.f32 %v175, %v238
  %v247 = vlaneseq
  %v248 = vshrl.u32 %v247, 7
  %v249 = vsub.s32 3, %v248
  %v250 = vrot.slane %v11, %v249
  %v251 = vlaneseq
  %v252 = vshrl.u32 %v251, 7
  %v253 = vsub.s32 3, %v252
  %v254 = vrot.slane %v12, %v253
  %v255 = vlaneseq
  %v256 = vshrl.u32 %v255, 7
  %v257 = vsub.s32 3, %v256
  %v258 = vrot.slane %v13, %v257
  %v259 = vlaneseq
  %v260 = vshrl.u32 %v259, 7
  %v261 = vsub.s32 3, %v260
  %v262 = vrot.slane %v14, %v261
  %v263 = vlaneseq
  %v264 = vshrl.u32 %v263, 7
  %v265 = vsub.s32 3, %v264
  %v266 = vrot.slane %v15, %v265
  %v267 = vlaneseq
  %v268 = vshrl.u32 %v267, 7
  %v269 = vsub.s32 3, %v268
  %v270 = vrot.slane %v16, %v269
  %v271 = vlaneseq
  %v272 = vshrl.u32 %v271, 7
  %v273 = vsub.s32 3, %v272
  %v274 = vrot.slane %v17, %v273
  %v275 = vlaneseq
  %v276 = vshrl.u32 %v275, 7
  %v277 = vsub.s32 3, %v276
  %v278 = vrot.slane %v18, %v277
  %v279 = vrot.slane %v19, 3
  %v280 = vrot.slane %v20, 2
  %v281 = vsel %vm68, %v280, %v279
  %v282 = vrot.slane %v21, 1
  %v283 = vsel %vm71, %v282, %v281
  %v284 = vsel %vm74, %v22, %v283
  %v285 = vrot.slane %v23, 7
  %v286 = vsel %vm77, %v285, %v284
  %v287 = vrot.slane %v24, 6
  %v288 = vsel %vm80, %v287, %v286
  %v289 = vrot.slane %v25, 5
  %v290 = vsel %vm83, %v289, %v288
  %v291 = vrot.slane %v26, 4
  %v292 = vsel %vm86, %v291, %v290
  %v294 = vsub.f32 %v250, %v292
  %v295 = vsub.f32 %v254, %v292
  %v296 = vsub.f32 %v258, %v292
  %v297 = vsub.f32 %v262, %v292
  %v298 = vsub.f32 %v266, %v292
  %v299 = vsub.f32 %v270, %v292
  %v300 = vsub.f32 %v274, %v292
  %v301 = vsub.f32 %v278, %v292
  %v302 = vmul.f32 %v294, %v294
  %v303 = vmul.f32 %v295, %v295
  %v304 = vmul.f32 %v296, %v296
  %v305 = vmul.f32 %v297, %v297
  %v306 = vmul.f32 %v298, %v298
  %v307 = vmul.f32 %v299, %v299
  %v308 = vmul.f32 %v300, %v300
  %v309 = vmul.f32 %v301, %v301
  %v310 = vadd.f32 %v239, %v302
  %v311 = vadd.f32 %v240, %v303
  %v312 = vadd.f32 %v241, %v304
  %v313 = vadd.f32 %v242, %v305
  %v314 = vadd.f32 %v243, %v306
  %v315 = vadd.f32 %v244, %v307
  %v316 = vadd.f32 %v245, %v308
  %v317 = vadd.f32 %v246, %v309
  %v318 = vrsqrt.pop %v310
  %v319 = vmul.f32 %v310, %v318
  %vm320 = vcmp.eq.f32.partialorder %v310, inf
  %v321 = vsel %vm320, %v310, %v319
  %vm322 = vcmp.eq.f32.partialorder %v310, 0.0
  %v323 = vand.u32 %v310, 2147483648
  %v324 = vsel %vm322, %v323, %v321
  %v325 = vrsqrt.pop %v311
  %v326 = vmul.f32 %v311, %v325
  %vm327 = vcmp.eq.f32.partialorder %v311, inf
  %v328 = vsel %vm327, %v311, %v326
  %vm329 = vcmp.eq.f32.partialorder %v311, 0.0
  %v330 = vand.u32 %v311, 2147483648
  %v331 = vsel %vm329, %v330, %v328
  %v332 = vrsqrt.pop %v312
  %v333 = vmul.f32 %v312, %v332
  %vm334 = vcmp.eq.f32.partialorder %v312, inf
  %v335 = vsel %vm334, %v312, %v333
  %vm336 = vcmp.eq.f32.partialorder %v312, 0.0
  %v337 = vand.u32 %v312, 2147483648
  %v338 = vsel %vm336, %v337, %v335
  %v339 = vrsqrt.pop %v313
  %v340 = vmul.f32 %v313, %v339
  %vm341 = vcmp.eq.f32.partialorder %v313, inf
  %v342 = vsel %vm341, %v313, %v340
  %vm343 = vcmp.eq.f32.partialorder %v313, 0.0
  %v344 = vand.u32 %v313, 2147483648
  %v345 = vsel %vm343, %v344, %v342
  %v346 = vrsqrt.pop %v314
  %v347 = vmul.f32 %v314, %v346
  %vm348 = vcmp.eq.f32.partialorder %v314, inf
  %v349 = vsel %vm348, %v314, %v347
  %vm350 = vcmp.eq.f32.partialorder %v314, 0.0
  %v351 = vand.u32 %v314, 2147483648
  %v352 = vsel %vm350, %v351, %v349
  %v353 = vrsqrt.pop %v315
  %v354 = vmul.f32 %v315, %v353
  %vm355 = vcmp.eq.f32.partialorder %v315, inf
  %v356 = vsel %vm355, %v315, %v354
  %vm357 = vcmp.eq.f32.partialorder %v315, 0.0
  %v358 = vand.u32 %v315, 2147483648
  %v359 = vsel %vm357, %v358, %v356
  %v360 = vrsqrt.pop %v316
  %v361 = vmul.f32 %v316, %v360
  %vm362 = vcmp.eq.f32.partialorder %v316, inf
  %v363 = vsel %vm362, %v316, %v361
  %vm364 = vcmp.eq.f32.partialorder %v316, 0.0
  %v365 = vand.u32 %v316, 2147483648
  %v366 = vsel %vm364, %v365, %v363
  %v367 = vrsqrt.pop %v317
  %v368 = vmul.f32 %v317, %v367
  %vm369 = vcmp.eq.f32.partialorder %v317, inf
  %v370 = vsel %vm369, %v317, %v368
  %vm371 = vcmp.eq.f32.partialorder %v317, 0.0
  %v372 = vand.u32 %v317, 2147483648
  %v373 = vsel %vm371, %v372, %v370
  %vm374 = vcmask 15360
  %375 = vst.msk [vmem:[%s2] sm:$0xff] %vm374, %v324
  %376 = vst.msk [vmem:[%s2 + $0x8] sm:$0xff] %vm374, %v331
  %377 = vst.msk [vmem:[%s2 + $0x10] sm:$0xff] %vm374, %v338
  %378 = vst.msk [vmem:[%s2 + $0x18] sm:$0xff] %vm374, %v345
  %379 = vst.msk [vmem:[%s2 + $0x20] sm:$0xff] %vm374, %v352
  %380 = vst.msk [vmem:[%s2 + $0x28] sm:$0xff] %vm374, %v359
  %381 = vst.msk [vmem:[%s2 + $0x30] sm:$0xff] %vm374, %v366
  %382 = vst.msk [vmem:[%s2 + $0x38] sm:$0xff] %vm374, %v373
  // Predicated region
  $region10: #{tpu_custom_call.1} parent=0 // pred_check
    _
  $region11: #{tpu_custom_call.1} parent=0 // pred_check_branch
    %384 = sbr.rel (0) target = $region13
  $region12: #{tpu_custom_call.1} parent=0 // pred_region
    _
  $region13: #{tpu_custom_call.1} parent=0 // pred_fallthru
    _
  // Predicated region
  $region14: #{tpu_custom_call.1} parent=0 // pred_check
    _
  $region15: #{tpu_custom_call.1} parent=0 // pred_check_branch
    %386 = sbr.rel (0) target = $region17
  $region16: #{tpu_custom_call.1} parent=0 // pred_region
    _
  $region17: #{tpu_custom_call.1} parent=0 // pred_fallthru
    _

</llo_original>
